<compile_context>
chip_gen: v6e
topology: v6e:2x2x1
jax: 0.10.0
libtpu: 0.0.40
codegen_flags: <defaults>
</compile_context>

<pallas_src>
import functools

import jax
import jax.numpy as jnp
import numpy as np
from jax.experimental import pallas as pl
from jax.experimental.pallas import tpu as pltpu


def _round_up(x, m):
    return (x + m - 1) // m * m


def _encoder_kernel(x_ref, w_ref, b_ref, o_ref, *, normalize):
    # x_ref: (TM, Dp) bf16, w_ref: (Dp, Ep) bf16, b_ref: (1, Ep) f32, o_ref: (TM, Ep) f32
    y = jnp.dot(x_ref[...], w_ref[...], preferred_element_type=jnp.float32)
    y = y + b_ref[...]                                     # bias broadcast over rows (f32)
    if normalize:
        # l2norm(X, dim=-1): X / (sqrt(sum(X^2, -1)) + 1e-8), divide -> reciprocal-multiply
        norm = jnp.sqrt(jnp.sum(y * y, axis=-1, keepdims=True)) + 1e-8
        y = y * pl.reciprocal(norm, approx=False)
    o_ref[...] = y.astype(o_ref.dtype)


def encoder_image_precomp(images, weight_t, bias, *, no_imgnorm=False, tm=256,
                          compute_dtype=jnp.bfloat16):
    """images: (B, R, img_dim); weight_t: (img_dim, embed) [W.T of torch Linear]; bias: (embed,)."""
    B, R, D = images.shape
    E = weight_t.shape[1]
    M = B * R
    out_dtype = images.dtype

    # Hardware-friendly padded sizes: lane dims to 128, rows to the tile (tile itself 8-aligned).
    Dp = _round_up(D, 128)
    Ep = _round_up(E, 128)
    tm_eff = min(tm, _round_up(M, 8))
    Mp = _round_up(M, tm_eff)

    x2d = images.reshape(M, D).astype(compute_dtype)
    if (Mp, Dp) != (M, D):
        x2d = jnp.pad(x2d, ((0, Mp - M), (0, Dp - D)))
    w = weight_t.astype(compute_dtype)
    if (Dp, Ep) != (D, E):
        w = jnp.pad(w, ((0, Dp - D), (0, Ep - E)))
    b2d = bias.astype(jnp.float32).reshape(1, E)
    if Ep != E:
        b2d = jnp.pad(b2d, ((0, 0), (0, Ep - E)))

    grid = (Mp // tm_eff,)

    # Cost hint for XLA's scheduler.
    cost = pl.CostEstimate(
        flops=2 * Mp * Dp * Ep,
        transcendentals=Mp,  # one sqrt (+ reciprocal) per row
        bytes_accessed=(x2d.size * x2d.dtype.itemsize
                        + w.size * w.dtype.itemsize
                        + b2d.size * b2d.dtype.itemsize
                        + Mp * Ep * jnp.dtype(out_dtype).itemsize),
    )

    # Rough VMEM need: double-buffered x/out tiles + resident (double-buffered) weight + bias.
    itc = jnp.dtype(compute_dtype).itemsize
    ito = jnp.dtype(out_dtype).itemsize
    vmem_est = (2 * tm_eff * Dp * itc + 2 * Dp * Ep * itc
                + 2 * Ep * 4 + 2 * tm_eff * Ep * ito)
    vmem_limit = None
    if vmem_est > 32 * 1024 * 1024:
        vmem_limit = min(int(vmem_est * 1.25), 100 * 1024 * 1024)

    kernel = functools.partial(_encoder_kernel, normalize=not no_imgnorm)

    out = pl.pallas_call(
        kernel,
        out_shape=jax.ShapeDtypeStruct((Mp, Ep), out_dtype),
        grid_spec=pltpu.PrefetchScalarGridSpec(
            num_scalar_prefetch=0,
            grid=grid,
            in_specs=[
                pl.BlockSpec((tm_eff, Dp), lambda i: (i, 0)),   # row tile of flattened images
                pl.BlockSpec((Dp, Ep), lambda i: (0, 0)),       # full weight, resident
                pl.BlockSpec((1, Ep), lambda i: (0, 0)),        # full bias, resident
            ],
            out_specs=pl.BlockSpec((tm_eff, Ep), lambda i: (i, 0)),
        ),
        compiler_params=pltpu.CompilerParams(
            dimension_semantics=("parallel",),
            vmem_limit_bytes=vmem_limit),
        cost_estimate=cost,
    )(x2d, w, b2d)

    # Strip row / lane padding and restore (B, R, E).
    return out[:M, :E].reshape(B, R, E)


def init_params(img_dim, embed_size, key):
    """Xavier-uniform weight (matches init_weights), zero bias; weight stored transposed."""
    r = np.sqrt(6.0) / np.sqrt(img_dim + embed_size)
    # torch weight is (embed_size, img_dim); Linear does x @ W.T -> store W.T directly.
    w = jax.random.uniform(key, (embed_size, img_dim), jnp.float32, minval=-r, maxval=r)
    weight_t = jnp.transpose(w)                           # (img_dim, embed_size)
    bias = jnp.zeros((embed_size,), jnp.float32)
    return weight_t, bias


def reference(images, weight_t, bias, *, no_imgnorm=False):
    y = jnp.einsum("brd,de->bre", images, weight_t) + bias
    if no_imgnorm:
        return y
    norm = jnp.sqrt(jnp.sum(y * y, axis=-1, keepdims=True)) + 1e-8
    return y / norm


if __name__ == "__main__":
    key = jax.random.PRNGKey(0)
    k_img, k_w = jax.random.split(key)

    batch, n_regions, img_dim, embed_size = 2, 8, 32, 64
    images = jax.random.normal(k_img, (batch, n_regions, img_dim), jnp.float32)
    weight_t, bias = init_params(img_dim, embed_size, k_w)

    # Default path (with L2 norm).
    out = encoder_image_precomp(images, weight_t, bias)
    out = jax.block_until_ready(out)
    ref = reference(images, weight_t, bias, no_imgnorm=False)
    # bf16 matmul inputs -> relaxed tolerance vs the f32 reference.
    np.testing.assert_allclose(np.asarray(out), np.asarray(ref), rtol=2e-2, atol=2e-2)

    # no_imgnorm path (skips the norm).
    out_nn = encoder_image_precomp(images, weight_t, bias, no_imgnorm=True)
    out_nn = jax.block_until_ready(out_nn)
    ref_nn = reference(images, weight_t, bias, no_imgnorm=True)
    np.testing.assert_allclose(np.asarray(out_nn), np.asarray(ref_nn), rtol=2e-2, atol=2e-2)

    print("KERNEL_OK")
</pallas_src>

<mosaic_0001>
module attributes {stable_mosaic.version = 11 : i64} {
  func.func @_encoder_kernel(%arg0: i32, %arg1: memref<16x128xbf16, #tpu.memory_space<vmem>>, %arg2: memref<128x128xbf16, #tpu.memory_space<vmem>>, %arg3: memref<1x128xf32, #tpu.memory_space<vmem>>, %arg4: memref<16x128xf32, #tpu.memory_space<vmem>>) attributes {dimension_semantics = [#tpu.dimension_semantics<parallel>], iteration_bounds = array<i64: 1>, scalar_prefetch = 0 : i64, scratch_operands = 0 : i64, tpu.core_type = #tpu.core_type<tc>, window_params = [{transform_indices = @transform_0, window_bounds = array<i64: 16, 128>}, {pipeline_mode = #tpu.pipeline_mode<synchronous>, transform_indices = @transform_1, window_bounds = array<i64: 128, 128>}, {pipeline_mode = #tpu.pipeline_mode<synchronous>, transform_indices = @transform_2, window_bounds = array<i64: 1, 128>}, {transform_indices = @transform_3, window_bounds = array<i64: 16, 128>}]} {
    %c0 = arith.constant 0 : index
    %c0_0 = arith.constant 0 : index
    %0 = vector.load %arg1[%c0, %c0_0] : memref<16x128xbf16, #tpu.memory_space<vmem>>, vector<16x128xbf16>
    %c0_1 = arith.constant 0 : index
    %c0_2 = arith.constant 0 : index
    %1 = vector.load %arg2[%c0_1, %c0_2] : memref<128x128xbf16, #tpu.memory_space<vmem>>, vector<128x128xbf16>
    %cst = arith.constant dense<0.000000e+00> : vector<16x128xf32>
    %2 = tpu.matmul %0, %1, %cst {dimension_numbers = #tpu.dot_dimension_numbers<[1], [0], [0], [1], [0, 0, 1, 1], [], []>} : vector<16x128xbf16>, vector<128x128xbf16>, vector<16x128xf32> -> vector<16x128xf32>
    %c0_3 = arith.constant 0 : index
    %c0_4 = arith.constant 0 : index
    %3 = vector.load %arg3[%c0_3, %c0_4] : memref<1x128xf32, #tpu.memory_space<vmem>>, vector<1x128xf32>
    %4 = vector.broadcast %3 : vector<1x128xf32> to vector<16x128xf32>
    %5 = arith.addf %2, %4 : vector<16x128xf32>
    %6 = arith.mulf %5, %5 : vector<16x128xf32>
    %cst_5 = arith.constant dense<0.000000e+00> : vector<16xf32>
    %7 = vector.multi_reduction <add>, %6, %cst_5 [1] : vector<16x128xf32> to vector<16xf32>
    %8 = vector.shape_cast %7 : vector<16xf32> to vector<16x1xf32>
    %9 = math.sqrt %8 : vector<16x1xf32>
    %cst_6 = arith.constant 9.99999993E-9 : f32
    %10 = vector.broadcast %cst_6 : f32 to vector<16x1xf32>
    %11 = arith.addf %9, %10 : vector<16x1xf32>
    %12 = tpu.reciprocal %11 : vector<16x1xf32> -> vector<16x1xf32>
    %13 = vector.broadcast %12 : vector<16x1xf32> to vector<16x128xf32>
    %14 = arith.mulf %5, %13 : vector<16x128xf32>
    %c0_7 = arith.constant 0 : index
    %c0_8 = arith.constant 0 : index
    %15 = vector.load %arg4[%c0_7, %c0_8] : memref<16x128xf32, #tpu.memory_space<vmem>>, vector<16x128xf32>
    tpu.vector_store %arg4[%c0_7, %c0_8], %14 {strides = array<i32>} : memref<16x128xf32, #tpu.memory_space<vmem>>, vector<16x128xf32>,
    return
  }
  func.func @transform_0(%arg0: i32) -> (i32, i32) {
    %c0_i32 = arith.constant 0 : i32
    %c0_i32_0 = arith.constant 0 : i32
    return %arg0, %c0_i32 : i32, i32
  }
  func.func @transform_1(%arg0: i32) -> (i32, i32) {
    %c0_i32 = arith.constant 0 : i32
    %c0_i32_0 = arith.constant 0 : i32
    %c0_i32_1 = arith.constant 0 : i32
    return %c0_i32, %c0_i32_0 : i32, i32
  }
  func.func @transform_2(%arg0: i32) -> (i32, i32) {
    %c0_i32 = arith.constant 0 : i32
    %c0_i32_0 = arith.constant 0 : i32
    %c0_i32_1 = arith.constant 0 : i32
    return %c0_i32, %c0_i32_0 : i32, i32
  }
  func.func @transform_3(%arg0: i32) -> (i32, i32) {
    %c0_i32 = arith.constant 0 : i32
    %c0_i32_0 = arith.constant 0 : i32
    return %arg0, %c0_i32 : i32, i32
  }
}

</mosaic_0001>

<llo_original>
// kernel: tpu_custom_call.1
$region0: #{tpu_custom_call.1}
  #allocation0 [shape = 'u32[]', space=smem, size = 0x4, offset = 0x4, fixed_abs, tag = 'smem constant byte address 0x4 - core index']
  #allocation1 [shape = 'u32[144,128]{1,0:T(1,128)}', space=vmem, size = 0x12000, scoped, tag = 'internal scratch']
  %s0 = inlined_call_operand.hbm [shape: bf16[16,128], index: 0, kind: input, shape index: {}]
  %s1 = inlined_call_operand.hbm [shape: bf16[128,128], index: 1, kind: input, shape index: {}]
  %s2 = inlined_call_operand.vmem [shape: f32[1,128], index: 2, kind: input, shape index: {}]
  %s3 = inlined_call_operand.hbm [shape: f32[16,128], index: 3, kind: output, shape index: {}]
  %s4 = sld [smem:[#allocation0]]
  $region30: #{tpu_custom_call.1} parent=0
    _
  %s6 = ssub.s32 1, %s4
  %s7 = scalar_select 0, %s6, %s4
  $region1: #{tpu_custom_call.1} parent=0
    #allocation2 [shape = 'u8[4096]{0}', space=vmem, size = 0x1000, scoped, tag = 'input window, operand 0, single buffered']
    #allocation3 [shape = 's32[1]{0}', space=sflag, size = 0x4, scoped, tag = 'scoped memory for tpu_custom_call.1']
    #allocation4 [shape = 's32[1]{0}', space=sflag, size = 0x4, scoped, tag = 'scoped memory for tpu_custom_call.1']
    #allocation5 [shape = 'u8[32768]{0}', space=vmem, size = 0x8000, scoped, tag = 'input window, operand 1, single buffered']
    #allocation6 [shape = 's32[1]{0}', space=sflag, size = 0x4, scoped, tag = 'scoped memory for tpu_custom_call.1']
    #allocation7 [shape = 'u8[8192]{0}', space=vmem, size = 0x2000, scoped, tag = 'output window, operand 0, single buffered']
    %8 = vsyncpa [#allocation3], 0
    %9 = vsyncpa [#allocation6], 0
    %10 = vsyncpa [#allocation4], 0
    // Predicated region
    $region2: #{tpu_custom_call.1} parent=1 // pred_check
      _
    $region3: #{tpu_custom_call.1} parent=1 // pred_check_branch
      %12 = sbr.rel (0) target = $region5
    $region4: #{tpu_custom_call.1} parent=1 // pred_region
      %s14 = ssub.s32 128, 128
      %15 = vsyncadd [#allocation3], %s14
      %s16 = sshll.u32 [#allocation2], 4
      %s17 = int_to_ptr.vmem [resolvable:$true] %s16
      %22 = dma.hbm_to_vmem [thread:$0]  %s0, 128, %s17, [#allocation3], 64, 64, 4
    $region5: #{tpu_custom_call.1} parent=1 // pred_fallthru
      _
    // Predicated region
    $region6: #{tpu_custom_call.1} parent=1 // pred_check
      _
    $region7: #{tpu_custom_call.1} parent=1 // pred_check_branch
      %24 = sbr.rel (0) target = $region9
    $region8: #{tpu_custom_call.1} parent=1 // pred_region
      %s26 = ssub.s32 1024, 1024
      %27 = vsyncadd [#allocation6], %s26
      %s28 = sshll.u32 [#allocation5], 4
      %s29 = int_to_ptr.vmem [resolvable:$true] %s28
      %34 = dma.hbm_to_vmem [thread:$0]  %s1, 1024, %s29, [#allocation6], 64, 64, 4
    $region9: #{tpu_custom_call.1} parent=1 // pred_fallthru
      _
    // Predicated region
    $region10: #{tpu_custom_call.1} parent=1 // pred_check
      _
    $region11: #{tpu_custom_call.1} parent=1 // pred_check_branch
      %36 = sbr.rel (0) target = $region13
    $region12: #{tpu_custom_call.1} parent=1 // pred_region
      _
    $region13: #{tpu_custom_call.1} parent=1 // pred_fallthru
      _
    // Predicated region
    $region14: #{tpu_custom_call.1} parent=1 // pred_check
      _
    $region15: #{tpu_custom_call.1} parent=1 // pred_check_branch
      %38 = sbr.rel (0) target = $region17
    $region16: #{tpu_custom_call.1} parent=1 // pred_region
      %39 = dma.done [#allocation3], 128
    $region17: #{tpu_custom_call.1} parent=1 // pred_fallthru
      _
    // Predicated region
    $region18: #{tpu_custom_call.1} parent=1 // pred_check
      _
    $region19: #{tpu_custom_call.1} parent=1 // pred_check_branch
      %41 = sbr.rel (0) target = $region21
    $region20: #{tpu_custom_call.1} parent=1 // pred_region
      %42 = dma.done [#allocation6], 1024
    $region21: #{tpu_custom_call.1} parent=1 // pred_fallthru
      _
    %v44 = vld [vmem:[#allocation2] sm:$0xf]
    %v45 = vld [vmem:[#allocation2 + $0x4] sm:$0xf]
    %v46 = vld [vmem:[#allocation5] sm:$0xf]
    %v47 = vld [vmem:[#allocation5 + $0x4] sm:$0xf]
    %v48 = vld [vmem:[#allocation5 + $0x8] sm:$0xf]
    %v49 = vld [vmem:[#allocation5 + $0xc] sm:$0xf]
    %v50 = vld [vmem:[#allocation5 + $0x10] sm:$0xf]
    %v51 = vld [vmem:[#allocation5 + $0x14] sm:$0xf]
    %v52 = vld [vmem:[#allocation5 + $0x18] sm:$0xf]
    %v53 = vld [vmem:[#allocation5 + $0x1c] sm:$0xf]
    %v54 = vld [vmem:[#allocation5 + $0x20] sm:$0xf]
    %v55 = vld [vmem:[#allocation5 + $0x24] sm:$0xf]
    %v56 = vld [vmem:[#allocation5 + $0x28] sm:$0xf]
    %v57 = vld [vmem:[#allocation5 + $0x2c] sm:$0xf]
    %v58 = vld [vmem:[#allocation5 + $0x30] sm:$0xf]
    %v59 = vld [vmem:[#allocation5 + $0x34] sm:$0xf]
    %v60 = vld [vmem:[#allocation5 + $0x38] sm:$0xf]
    %v61 = vld [vmem:[#allocation5 + $0x3c] sm:$0xf]
    %v62 = vld [vmem:[%s2] sm:$0x1]
    %v64 = vlaneseq
    %v65 = vshrl.u32 %v64, 7
    %v66 = vsub.s32 0, %v65
    %v67 = vrot.slane %v62, %v66
    %v71 = vunpack.c.l.b16 %v44
    %v72 = vunpack.c.l.b16 %v45
    %v73 = vpack.c.b16 %v72, %v71
    %v91 = vunpack.c.l.b16 %v46
    %v92 = vunpack.c.l.b16 %v47
    %v93 = vunpack.c.l.b16 %v48
    %v94 = vunpack.c.l.b16 %v49
    %v95 = vunpack.c.l.b16 %v50
    %v96 = vunpack.c.l.b16 %v51
    %v97 = vunpack.c.l.b16 %v52
    %v98 = vunpack.c.l.b16 %v53
    %v99 = vunpack.c.l.b16 %v54
    %v100 = vunpack.c.l.b16 %v55
    %v101 = vunpack.c.l.b16 %v56
    %v102 = vunpack.c.l.b16 %v57
    %v103 = vunpack.c.l.b16 %v58
    %v104 = vunpack.c.l.b16 %v59
    %v105 = vunpack.c.l.b16 %v60
    %v106 = vunpack.c.l.b16 %v61
    %v107 = vpack.c.b16 %v92, %v91
    %v108 = vpack.c.b16 %v94, %v93
    %v109 = vpack.c.b16 %v96, %v95
    %v110 = vpack.c.b16 %v98, %v97
    %v111 = vpack.c.b16 %v100, %v99
    %v112 = vpack.c.b16 %v102, %v101
    %v113 = vpack.c.b16 %v104, %v103
    %v114 = vpack.c.b16 %v106, %v105
    %123 = vmatprep.subr.bf16.mxu0 0
    %124 = vmatpush1.bf16.msra.mxu0 %v114
    %125 = vmatprep.subr.bf16.mxu0 0
    %126 = vmatpush1.bf16.msra.mxu0 %v113
    %127 = vmatprep.subr.bf16.mxu0 0
    %128 = vmatpush1.bf16.msra.mxu0 %v112
    %129 = vmatprep.subr.bf16.mxu0 0
    %130 = vmatpush1.bf16.msra.mxu0 %v111
    %131 = vmatprep.subr.bf16.mxu0 0
    %132 = vmatpush1.bf16.msra.mxu0 %v110
    %133 = vmatprep.subr.bf16.mxu0 0
    %134 = vmatpush1.bf16.msra.mxu0 %v109
    %135 = vmatprep.subr.bf16.mxu0 0
    %136 = vmatpush1.bf16.msra.mxu0 %v108
    %137 = vmatprep.subr.bf16.mxu0 0
    %138 = vmatpush1.bf16.msra.mxu0 %v107
    %139 = vmatprep.subr.bf16.mxu0 0
    %140 = vmatpush2.bf16.msra.mxu0 0
    %141 = vmatprep.subr.bf16.mxu0 0
    %142 = vmatpush2.bf16.msra.mxu0 0
    %143 = vmatprep.subr.bf16.mxu0 0
    %144 = vmatpush2.bf16.msra.mxu0 0
    %145 = vmatprep.subr.bf16.mxu0 0
    %146 = vmatpush2.bf16.msra.mxu0 0
    %147 = vmatprep.subr.bf16.mxu0 0
    %148 = vmatpush2.bf16.msra.mxu0 0
    %149 = vmatprep.subr.bf16.mxu0 0
    %150 = vmatpush2.bf16.msra.mxu0 0
    %151 = vmatprep.subr.bf16.mxu0 0
    %152 = vmatpush2.bf16.msra.mxu0 0
    %153 = vmatprep.subr.bf16.mxu0 0
    %154 = vmatpush2.bf16.msra.mxu0 0
    %155 = vmatprep.mubr.bf16.mxu0 0
    %156 = vmatmul.mubr.bf16.gmra.mxu0 %v73
    %v157 = vpop.f32.mrf.mxu0
    %v158 = vadd.f32 %v67, %v157
    %v159 = vpop.f32.mrf.mxu0
    %v160 = vpop.f32.mrf.mxu0
    %v161 = vadd.f32 %v67, %v160
    %v162 = vpop.f32.mrf.mxu0
    %163 = vdwg.mxu0
    %v164 = vmul.f32 %v158, %v158
    %v165 = vmul.f32 %v161, %v161
    %166 = vadd.xlane.f32.xlu0 %v164
    %v167 = vpop.xlane.xlu0 %166
    %168 = vadd.xlane.f32.xlu0 %v165
    %v169 = vpop.xlane.xlu0 %168
    %v170 = vrsqrt.pop %v167
    %v171 = vmul.f32 %v167, %v170
    %vm172 = vcmp.eq.f32.partialorder %v167, inf
    %v173 = vsel %vm172, %v167, %v171
    %vm174 = vcmp.eq.f32.partialorder %v167, 0.0
    %v175 = vand.u32 %v167, 2147483648
    %v176 = vsel %vm174, %v175, %v173
    %v177 = vrsqrt.pop %v169
    %v178 = vmul.f32 %v169, %v177
    %vm179 = vcmp.eq.f32.partialorder %v169, inf
    %v180 = vsel %vm179, %v169, %v178
    %vm181 = vcmp.eq.f32.partialorder %v169, 0.0
    %v182 = vand.u32 %v169, 2147483648
    %v183 = vsel %vm181, %v182, %v180
    %v184 = vadd.f32 %v176, 1e-08
    %v185 = vadd.f32 %v183, 1e-08
    %v186 = vrcp.pop %v184
    %v187 = vrcp.pop %v185
    %v188 = vmul.f32 %v158, %v186
    %v189 = vmul.f32 %v161, %v187
    %190 = vst [vmem:[#allocation7] sm:$0xff] %v188
    %191 = vst [vmem:[#allocation7 + $0x8] sm:$0xff] %v189
    // Predicated region
    $region22: #{tpu_custom_call.1} parent=1 // pred_check
      _
    $region23: #{tpu_custom_call.1} parent=1 // pred_check_branch
      %193 = sbr.rel (0) target = $region25
    $region24: #{tpu_custom_call.1} parent=1 // pred_region
      %s195 = ssub.s32 256, 256
      %196 = vsyncadd [#allocation4], %s195
      %s197 = sshll.u32 [#allocation7], 4
      %s198 = int_to_ptr.vmem [resolvable:$true] %s197
      %203 = dma.vmem_to_hbm [thread:$0]  %s198, 256, %s3, [#allocation4], 128, 128, 8
    $region25: #{tpu_custom_call.1} parent=1 // pred_fallthru
      _
    // Predicated region
    $region26: #{tpu_custom_call.1} parent=1 // pred_check
      _
    $region27: #{tpu_custom_call.1} parent=1 // pred_check_branch
      %205 = sbr.rel (0) target = $region29
    $region28: #{tpu_custom_call.1} parent=1 // pred_region
      %206 = dma.done [#allocation4], 256
    $region29: #{tpu_custom_call.1} parent=1 // pred_fallthru
      _
    %207 = vsyncpa [#allocation3], 1
    %208 = vsyncpa [#allocation6], 1
    %209 = vsyncpa [#allocation4], 1

</llo_original>
